<compile_context>
chip_gen: v6e
topology: v6e:2x2x1
jax: 0.10.0
libtpu: 0.0.40
codegen_flags: <defaults>
</compile_context>

<pallas_src>
import functools

import numpy as np
import jax
import jax.numpy as jnp
from jax.experimental import pallas as pl
from jax.experimental.pallas import tpu as pltpu

EPS = 1e-5


def _vmem_limit_bytes():
    """Scoped-VMEM budget derived from the chip (v5e/v6e: 128 MiB, v7x: 64 MiB)."""
    try:
        cap = pltpu.get_tpu_info().vmem_capacity_bytes
    except Exception:
        cap = 64 * 1024 * 1024
    return int(min(cap * 3 // 4, 100 * 1024 * 1024))


def _pick_slab(h_out, w_out, max_m=128):
    """Largest divisor of H_out whose rows*W_out matmul M-dim stays <= max_m.

    M ~ 128 keeps the f32 (M, C_out) accumulator and the packed (M, KH*KW*C_in)
    operand (which coexist around the single jnp.dot) clear of the 64-vreg file.
    """
    for d in range(h_out, 0, -1):
        if h_out % d == 0 and d * w_out <= max_m:
            return d
    return 1


def _conv_slab(x_ref, w_ref, pk_ref, *, slab_h, W_out, KH, KW, C_in):
    """One spatial slab of the stride-1 conv as a single big-K MXU matmul.

    x_ref : (Hp, Wp, C_in) padded NHWC image (resident across h-slabs).
    w_ref : (KH*KW*C_in, C_out) weights, K ordered (kh, kw, c_in).
    pk_ref: (slab_h*W_out, KH*KW*C_in) VMEM scratch — im2col in VMEM only.
    Returns f32 (slab_h*W_out, C_out).
    """
    M = slab_h * W_out
    h0 = pl.multiple_of(pl.program_id(1) * slab_h, slab_h)
    for kh in range(KH):                      # static unroll over the KH*KW packing stores
        for kw in range(KW):
            tap = kh * KW + kw
            xt = x_ref[pl.ds(h0 + kh, slab_h), pl.ds(kw, W_out), :]
            pk_ref[:, tap * C_in:(tap + 1) * C_in] = xt.reshape(M, C_in)
    # ONE matmul with contraction depth KH*KW*C_in (accumulation inside the MXU).
    return jnp.dot(pk_ref[...], w_ref[...], preferred_element_type=jnp.float32)


def _stats_kernel(x_ref, w_ref, stats_ref, pk_ref, *, slab_h, W_out, KH, KW, C_in):
    """Pass 1: per-tile (sum, centered sum-of-squares) of the conv output."""
    acc = _conv_slab(x_ref, w_ref, pk_ref,
                     slab_h=slab_h, W_out=W_out, KH=KH, KW=KW, C_in=C_in)
    inv_m = 1.0 / float(slab_h * W_out)
    s = jnp.sum(acc, axis=0, keepdims=True)               # (1, C_out)
    d = acc - s * inv_m                                    # center about the tile mean
    q = jnp.sum(d * d, axis=0, keepdims=True)              # (1, C_out)
    stats_ref[...] = jnp.concatenate([s, q], axis=0)       # (2, C_out)


def _affine_kernel(x_ref, w_ref, sb_ref, o_ref, pk_ref, *, slab_h, W_out, KH, KW, C_in):
    """Pass 2: recompute the conv slab and apply the folded BN affine (one FMA)."""
    acc = _conv_slab(x_ref, w_ref, pk_ref,
                     slab_h=slab_h, W_out=W_out, KH=KH, KW=KW, C_in=C_in)
    y = acc * sb_ref[0:1, :] + sb_ref[1:2, :]
    o_ref[...] = y.reshape(slab_h, W_out, -1).astype(o_ref.dtype)


def conv_bn_2d(x, weight, gamma, beta, *, padding=1, eps=EPS,
               compute_dtype=jnp.bfloat16):
    """x: (N, C_in, H, W) f32; weight: (C_out, C_in, KH, KW); gamma/beta: (C_out,).

    Matmul operands are cast to `compute_dtype` (bf16 default -> bf16 MXU rate,
    half the DMA bytes); accumulation, batch statistics and the BN affine stay f32.
    """
    N, C_in, H, W = x.shape
    C_out, C_in_w, KH, KW = weight.shape
    assert C_in == C_in_w
    H_out = H + 2 * padding - KH + 1
    W_out = W + 2 * padding - KW + 1
    Hp, Wp = H + 2 * padding, W + 2 * padding
    K_pack = KH * KW * C_in

    slab_h = _pick_slab(H_out, W_out)
    n_slabs = H_out // slab_h
    M = slab_h * W_out

    # ---- layout glue (single fused XLA pass): NCHW -> padded NHWC, cast ----
    xp = jnp.pad(jnp.transpose(x, (0, 2, 3, 1)),
                 ((0, 0), (padding, padding), (padding, padding), (0, 0))
                 ).astype(compute_dtype)

    # weight (C_out, C_in, KH, KW) -> (KH*KW*C_in, C_out), K ordered (kh, kw, c_in)
    w2 = jnp.transpose(weight, (2, 3, 1, 0)).reshape(K_pack, C_out).astype(compute_dtype)

    cparams = pltpu.CompilerParams(
        dimension_semantics=("parallel", "parallel"),   # N x H-slabs: megacore friendly
        vmem_limit_bytes=_vmem_limit_bytes(),
    )

    itemsize = jnp.dtype(compute_dtype).itemsize
    conv_flops = 2 * N * H_out * W_out * K_pack * C_out
    in_bytes = N * Hp * Wp * C_in * itemsize + K_pack * C_out * itemsize

    x_spec = pl.BlockSpec((None, Hp, Wp, C_in), lambda n, h: (n, 0, 0, 0))
    w_spec = pl.BlockSpec((K_pack, C_out), lambda n, h: (0, 0))
    scratch = [pltpu.VMEM((M, K_pack), compute_dtype)]

    # ---- pass 1: conv -> per-tile (sum, centered sumsq) --------------------------
    partial = pl.pallas_call(
        functools.partial(_stats_kernel, slab_h=slab_h, W_out=W_out,
                          KH=KH, KW=KW, C_in=C_in),
        out_shape=jax.ShapeDtypeStruct((N, n_slabs, 2, C_out), jnp.float32),
        grid=(N, n_slabs),
        in_specs=[x_spec, w_spec],
        out_specs=pl.BlockSpec((None, None, 2, C_out), lambda n, h: (n, h, 0, 0)),
        scratch_shapes=scratch,
        compiler_params=cparams,
        cost_estimate=pl.CostEstimate(
            flops=conv_flops, transcendentals=0,
            bytes_accessed=in_bytes + N * n_slabs * 2 * C_out * 4),
    )(xp, w2)

    # ---- combine tile stats (Chan parallel-variance: no E[x^2]-E[x]^2 cancellation)
    m = float(M)
    total_n = float(N * n_slabs * M)
    sums = partial[:, :, 0, :].reshape(-1, C_out)
    qs = partial[:, :, 1, :].reshape(-1, C_out)
    mean = jnp.sum(sums, axis=0) / total_n
    mu_t = sums / m
    var = (jnp.sum(qs, axis=0) + m * jnp.sum((mu_t - mean) ** 2, axis=0)) / total_n
    var = jnp.maximum(var, 0.0)                       # biased var, like training BN
    scale = gamma.astype(jnp.float32) * jax.lax.rsqrt(var + eps)
    bias = beta.astype(jnp.float32) - mean * scale
    sb = jnp.stack([scale, bias], axis=0)             # (2, C_out) f32

    # ---- pass 2: recompute conv slab + fused affine (no intermediate y in HBM) ---
    out_nhwc = pl.pallas_call(
        functools.partial(_affine_kernel, slab_h=slab_h, W_out=W_out,
                          KH=KH, KW=KW, C_in=C_in),
        out_shape=jax.ShapeDtypeStruct((N, H_out, W_out, C_out), jnp.float32),
        grid=(N, n_slabs),
        in_specs=[x_spec, w_spec, pl.BlockSpec((2, C_out), lambda n, h: (0, 0))],
        out_specs=pl.BlockSpec((None, slab_h, W_out, C_out), lambda n, h: (n, h, 0, 0)),
        scratch_shapes=scratch,
        compiler_params=cparams,
        cost_estimate=pl.CostEstimate(
            flops=conv_flops, transcendentals=0,
            bytes_accessed=in_bytes + N * H_out * W_out * C_out * 4),
    )(xp, w2, sb)

    # NHWC -> NCHW (public PyTorch-style layout)
    return jnp.transpose(out_nhwc, (0, 3, 1, 2))


def _reference(x, weight, gamma, beta):
    y = jax.lax.conv_general_dilated(
        x, weight, window_strides=(1, 1), padding=((1, 1), (1, 1)),
        dimension_numbers=("NCHW", "OIHW", "NCHW"))
    mean = y.mean(axis=(0, 2, 3), keepdims=True)
    var = y.var(axis=(0, 2, 3), keepdims=True)        # biased, like training BN
    return (y - mean) / jnp.sqrt(var + EPS) * gamma.reshape(1, -1, 1, 1) \
        + beta.reshape(1, -1, 1, 1)


if __name__ == "__main__":
    key = jax.random.PRNGKey(0)
    kx, kw = jax.random.split(key)

    N, C_in, C_out, H, W = 2, 4, 8, 16, 16
    x = jax.random.normal(kx, (N, C_in, H, W), dtype=jnp.float32)
    weight = jax.random.normal(kw, (C_out, C_in, 3, 3), dtype=jnp.float32) * 0.1
    gamma = jnp.ones((C_out,), jnp.float32)            # PyTorch BN init
    beta = jnp.zeros((C_out,), jnp.float32)

    ref = _reference(x, weight, gamma, beta)

    # f32 operands: bitwise-comparable semantics to the PyTorch/XLA f32 reference.
    out_f32 = jax.block_until_ready(
        conv_bn_2d(x, weight, gamma, beta, compute_dtype=jnp.float32))
    np.testing.assert_allclose(np.asarray(out_f32), np.asarray(ref),
                               rtol=1e-3, atol=1e-3)

    # Default bf16 MXU path (f32 accumulate/stats/affine): looser tolerance by design.
    out_bf16 = jax.block_until_ready(conv_bn_2d(x, weight, gamma, beta))
    np.testing.assert_allclose(np.asarray(out_bf16), np.asarray(ref),
                               rtol=5e-2, atol=5e-2)

    print("KERNEL_OK")
</pallas_src>

<mosaic_0001>
module attributes {stable_mosaic.version = 11 : i64} {
  func.func @_stats_kernel(%arg0: i32, %arg1: i32, %arg2: memref<1x18x18x4xf32, #tpu.memory_space<vmem>>, %arg3: memref<36x8xf32, #tpu.memory_space<vmem>>, %arg4: memref<1x1x2x8xf32, #tpu.memory_space<vmem>>, %arg5: memref<128x36xf32, #tpu.memory_space<vmem>>) attributes {dimension_semantics = [#tpu.dimension_semantics<parallel>, #tpu.dimension_semantics<parallel>], iteration_bounds = array<i64: 2, 2>, scalar_prefetch = 0 : i64, scratch_operands = 1 : i64, tpu.core_type = #tpu.core_type<tc>, window_params = [{transform_indices = @transform_0, window_bounds = array<i64: 1, 18, 18, 4>}, {pipeline_mode = #tpu.pipeline_mode<synchronous>, transform_indices = @transform_1, window_bounds = array<i64: 36, 8>}, {transform_indices = @transform_2, window_bounds = array<i64: 1, 1, 2, 8>}]} {
    %c8_i32 = arith.constant 8 : i32
    %0 = arith.muli %arg1, %c8_i32 : i32
    %1 = tpu.assume_multiple %0, 8 : i32
    %c0_i32 = arith.constant 0 : i32
    %2 = arith.addi %1, %c0_i32 : i32
    %c0 = arith.constant 0 : index
    %3 = arith.index_cast %2 : i32 to index
    %c0_0 = arith.constant 0 : index
    %c0_1 = arith.constant 0 : index
    %4 = vector.load %arg2[%c0, %3, %c0_0, %c0_1] : memref<1x18x18x4xf32, #tpu.memory_space<vmem>>, vector<1x8x16x4xf32>
    %5 = vector.shape_cast %4 : vector<1x8x16x4xf32> to vector<8x16x4xf32>
    %6 = vector.shape_cast %5 : vector<8x16x4xf32> to vector<128x4xf32>
    %c0_2 = arith.constant 0 : index
    %c0_3 = arith.constant 0 : index
    %7 = vector.load %arg5[%c0_2, %c0_3] : memref<128x36xf32, #tpu.memory_space<vmem>>, vector<128x4xf32>
    tpu.vector_store %arg5[%c0_2, %c0_3], %6 {strides = array<i32>} : memref<128x36xf32, #tpu.memory_space<vmem>>, vector<128x4xf32>,
    %c0_i32_4 = arith.constant 0 : i32
    %8 = arith.addi %1, %c0_i32_4 : i32
    %c0_5 = arith.constant 0 : index
    %9 = arith.index_cast %8 : i32 to index
    %c1 = arith.constant 1 : index
    %c0_6 = arith.constant 0 : index
    %10 = vector.load %arg2[%c0_5, %9, %c1, %c0_6] : memref<1x18x18x4xf32, #tpu.memory_space<vmem>>, vector<1x8x16x4xf32>
    %11 = vector.shape_cast %10 : vector<1x8x16x4xf32> to vector<8x16x4xf32>
    %12 = vector.shape_cast %11 : vector<8x16x4xf32> to vector<128x4xf32>
    %c0_7 = arith.constant 0 : index
    %c4 = arith.constant 4 : index
    %13 = vector.load %arg5[%c0_7, %c4] : memref<128x36xf32, #tpu.memory_space<vmem>>, vector<128x4xf32>
    tpu.vector_store %arg5[%c0_7, %c4], %12 {strides = array<i32>} : memref<128x36xf32, #tpu.memory_space<vmem>>, vector<128x4xf32>,
    %c0_i32_8 = arith.constant 0 : i32
    %14 = arith.addi %1, %c0_i32_8 : i32
    %c0_9 = arith.constant 0 : index
    %15 = arith.index_cast %14 : i32 to index
    %c2 = arith.constant 2 : index
    %c0_10 = arith.constant 0 : index
    %16 = vector.load %arg2[%c0_9, %15, %c2, %c0_10] : memref<1x18x18x4xf32, #tpu.memory_space<vmem>>, vector<1x8x16x4xf32>
    %17 = vector.shape_cast %16 : vector<1x8x16x4xf32> to vector<8x16x4xf32>
    %18 = vector.shape_cast %17 : vector<8x16x4xf32> to vector<128x4xf32>
    %c0_11 = arith.constant 0 : index
    %c8 = arith.constant 8 : index
    %19 = vector.load %arg5[%c0_11, %c8] : memref<128x36xf32, #tpu.memory_space<vmem>>, vector<128x4xf32>
    tpu.vector_store %arg5[%c0_11, %c8], %18 {strides = array<i32>} : memref<128x36xf32, #tpu.memory_space<vmem>>, vector<128x4xf32>,
    %c1_i32 = arith.constant 1 : i32
    %20 = arith.addi %1, %c1_i32 : i32
    %c0_12 = arith.constant 0 : index
    %21 = arith.index_cast %20 : i32 to index
    %c0_13 = arith.constant 0 : index
    %c0_14 = arith.constant 0 : index
    %22 = vector.load %arg2[%c0_12, %21, %c0_13, %c0_14] : memref<1x18x18x4xf32, #tpu.memory_space<vmem>>, vector<1x8x16x4xf32>
    %23 = vector.shape_cast %22 : vector<1x8x16x4xf32> to vector<8x16x4xf32>
    %24 = vector.shape_cast %23 : vector<8x16x4xf32> to vector<128x4xf32>
    %c0_15 = arith.constant 0 : index
    %c12 = arith.constant 12 : index
    %25 = vector.load %arg5[%c0_15, %c12] : memref<128x36xf32, #tpu.memory_space<vmem>>, vector<128x4xf32>
    tpu.vector_store %arg5[%c0_15, %c12], %24 {strides = array<i32>} : memref<128x36xf32, #tpu.memory_space<vmem>>, vector<128x4xf32>,
    %c1_i32_16 = arith.constant 1 : i32
    %26 = arith.addi %1, %c1_i32_16 : i32
    %c0_17 = arith.constant 0 : index
    %27 = arith.index_cast %26 : i32 to index
    %c1_18 = arith.constant 1 : index
    %c0_19 = arith.constant 0 : index
    %28 = vector.load %arg2[%c0_17, %27, %c1_18, %c0_19] : memref<1x18x18x4xf32, #tpu.memory_space<vmem>>, vector<1x8x16x4xf32>
    %29 = vector.shape_cast %28 : vector<1x8x16x4xf32> to vector<8x16x4xf32>
    %30 = vector.shape_cast %29 : vector<8x16x4xf32> to vector<128x4xf32>
    %c0_20 = arith.constant 0 : index
    %c16 = arith.constant 16 : index
    %31 = vector.load %arg5[%c0_20, %c16] : memref<128x36xf32, #tpu.memory_space<vmem>>, vector<128x4xf32>
    tpu.vector_store %arg5[%c0_20, %c16], %30 {strides = array<i32>} : memref<128x36xf32, #tpu.memory_space<vmem>>, vector<128x4xf32>,
    %c1_i32_21 = arith.constant 1 : i32
    %32 = arith.addi %1, %c1_i32_21 : i32
    %c0_22 = arith.constant 0 : index
    %33 = arith.index_cast %32 : i32 to index
    %c2_23 = arith.constant 2 : index
    %c0_24 = arith.constant 0 : index
    %34 = vector.load %arg2[%c0_22, %33, %c2_23, %c0_24] : memref<1x18x18x4xf32, #tpu.memory_space<vmem>>, vector<1x8x16x4xf32>
    %35 = vector.shape_cast %34 : vector<1x8x16x4xf32> to vector<8x16x4xf32>
    %36 = vector.shape_cast %35 : vector<8x16x4xf32> to vector<128x4xf32>
    %c0_25 = arith.constant 0 : index
    %c20 = arith.constant 20 : index
    %37 = vector.load %arg5[%c0_25, %c20] : memref<128x36xf32, #tpu.memory_space<vmem>>, vector<128x4xf32>
    tpu.vector_store %arg5[%c0_25, %c20], %36 {strides = array<i32>} : memref<128x36xf32, #tpu.memory_space<vmem>>, vector<128x4xf32>,
    %c2_i32 = arith.constant 2 : i32
    %38 = arith.addi %1, %c2_i32 : i32
    %c0_26 = arith.constant 0 : index
    %39 = arith.index_cast %38 : i32 to index
    %c0_27 = arith.constant 0 : index
    %c0_28 = arith.constant 0 : index
    %40 = vector.load %arg2[%c0_26, %39, %c0_27, %c0_28] : memref<1x18x18x4xf32, #tpu.memory_space<vmem>>, vector<1x8x16x4xf32>
    %41 = vector.shape_cast %40 : vector<1x8x16x4xf32> to vector<8x16x4xf32>
    %42 = vector.shape_cast %41 : vector<8x16x4xf32> to vector<128x4xf32>
    %c0_29 = arith.constant 0 : index
    %c24 = arith.constant 24 : index
    %43 = vector.load %arg5[%c0_29, %c24] : memref<128x36xf32, #tpu.memory_space<vmem>>, vector<128x4xf32>
    tpu.vector_store %arg5[%c0_29, %c24], %42 {strides = array<i32>} : memref<128x36xf32, #tpu.memory_space<vmem>>, vector<128x4xf32>,
    %c2_i32_30 = arith.constant 2 : i32
    %44 = arith.addi %1, %c2_i32_30 : i32
    %c0_31 = arith.constant 0 : index
    %45 = arith.index_cast %44 : i32 to index
    %c1_32 = arith.constant 1 : index
    %c0_33 = arith.constant 0 : index
    %46 = vector.load %arg2[%c0_31, %45, %c1_32, %c0_33] : memref<1x18x18x4xf32, #tpu.memory_space<vmem>>, vector<1x8x16x4xf32>
    %47 = vector.shape_cast %46 : vector<1x8x16x4xf32> to vector<8x16x4xf32>
    %48 = vector.shape_cast %47 : vector<8x16x4xf32> to vector<128x4xf32>
    %c0_34 = arith.constant 0 : index
    %c28 = arith.constant 28 : index
    %49 = vector.load %arg5[%c0_34, %c28] : memref<128x36xf32, #tpu.memory_space<vmem>>, vector<128x4xf32>
    tpu.vector_store %arg5[%c0_34, %c28], %48 {strides = array<i32>} : memref<128x36xf32, #tpu.memory_space<vmem>>, vector<128x4xf32>,
    %c2_i32_35 = arith.constant 2 : i32
    %50 = arith.addi %1, %c2_i32_35 : i32
    %c0_36 = arith.constant 0 : index
    %51 = arith.index_cast %50 : i32 to index
    %c2_37 = arith.constant 2 : index
    %c0_38 = arith.constant 0 : index
    %52 = vector.load %arg2[%c0_36, %51, %c2_37, %c0_38] : memref<1x18x18x4xf32, #tpu.memory_space<vmem>>, vector<1x8x16x4xf32>
    %53 = vector.shape_cast %52 : vector<1x8x16x4xf32> to vector<8x16x4xf32>
    %54 = vector.shape_cast %53 : vector<8x16x4xf32> to vector<128x4xf32>
    %c0_39 = arith.constant 0 : index
    %c32 = arith.constant 32 : index
    %55 = vector.load %arg5[%c0_39, %c32] : memref<128x36xf32, #tpu.memory_space<vmem>>, vector<128x4xf32>
    tpu.vector_store %arg5[%c0_39, %c32], %54 {strides = array<i32>} : memref<128x36xf32, #tpu.memory_space<vmem>>, vector<128x4xf32>,
    %c0_40 = arith.constant 0 : index
    %c0_41 = arith.constant 0 : index
    %56 = vector.load %arg5[%c0_40, %c0_41] : memref<128x36xf32, #tpu.memory_space<vmem>>, vector<128x36xf32>
    %c0_42 = arith.constant 0 : index
    %c0_43 = arith.constant 0 : index
    %57 = vector.load %arg3[%c0_42, %c0_43] : memref<36x8xf32, #tpu.memory_space<vmem>>, vector<36x8xf32>
    %cst = arith.constant dense<0.000000e+00> : vector<128x8xf32>
    %58 = tpu.matmul %56, %57, %cst {dimension_numbers = #tpu.dot_dimension_numbers<[1], [0], [0], [1], [0, 0, 1, 1], [], []>} : vector<128x36xf32>, vector<36x8xf32>, vector<128x8xf32> -> vector<128x8xf32>
    %cst_44 = arith.constant dense<0.000000e+00> : vector<8xf32>
    %59 = vector.multi_reduction <add>, %58, %cst_44 [0] : vector<128x8xf32> to vector<8xf32>
    %60 = vector.shape_cast %59 : vector<8xf32> to vector<1x8xf32>
    %cst_45 = arith.constant 7.812500e-03 : f32
    %61 = vector.broadcast %cst_45 : f32 to vector<1x8xf32>
    %62 = arith.mulf %60, %61 : vector<1x8xf32>
    %63 = vector.broadcast %62 : vector<1x8xf32> to vector<128x8xf32>
    %64 = arith.subf %58, %63 : vector<128x8xf32>
    %65 = arith.mulf %64, %64 : vector<128x8xf32>
    %cst_46 = arith.constant dense<0.000000e+00> : vector<8xf32>
    %66 = vector.multi_reduction <add>, %65, %cst_46 [0] : vector<128x8xf32> to vector<8xf32>
    %67 = vector.shape_cast %66 : vector<8xf32> to vector<1x8xf32>
    %68 = tpu.concatenate %60, %67 in 0 : vector<1x8xf32>, vector<1x8xf32> -> vector<2x8xf32>
    %c0_47 = arith.constant 0 : index
    %c0_48 = arith.constant 0 : index
    %c0_49 = arith.constant 0 : index
    %c0_50 = arith.constant 0 : index
    %69 = vector.load %arg4[%c0_47, %c0_48, %c0_49, %c0_50] : memref<1x1x2x8xf32, #tpu.memory_space<vmem>>, vector<1x1x2x8xf32>
    %70 = vector.shape_cast %69 : vector<1x1x2x8xf32> to vector<2x8xf32>
    %71 = vector.shape_cast %68 : vector<2x8xf32> to vector<1x1x2x8xf32>
    tpu.vector_store %arg4[%c0_47, %c0_48, %c0_49, %c0_50], %71 {strides = array<i32>} : memref<1x1x2x8xf32, #tpu.memory_space<vmem>>, vector<1x1x2x8xf32>,
    return
  }
  func.func @transform_0(%arg0: i32, %arg1: i32) -> (i32, i32, i32, i32) {
    %c0_i32 = arith.constant 0 : i32
    %c0_i32_0 = arith.constant 0 : i32
    %c0_i32_1 = arith.constant 0 : i32
    %c0_i32_2 = arith.constant 0 : i32
    return %arg0, %c0_i32, %c0_i32_0, %c0_i32_1 : i32, i32, i32, i32
  }
  func.func @transform_1(%arg0: i32, %arg1: i32) -> (i32, i32) {
    %c0_i32 = arith.constant 0 : i32
    %c0_i32_0 = arith.constant 0 : i32
    %c0_i32_1 = arith.constant 0 : i32
    return %c0_i32, %c0_i32_0 : i32, i32
  }
  func.func @transform_2(%arg0: i32, %arg1: i32) -> (i32, i32, i32, i32) {
    %c0_i32 = arith.constant 0 : i32
    %c0_i32_0 = arith.constant 0 : i32
    %c0_i32_1 = arith.constant 0 : i32
    return %arg0, %arg1, %c0_i32, %c0_i32_0 : i32, i32, i32, i32
  }
}

</mosaic_0001>

<llo_original>
// kernel: tpu_custom_call.1
$region0: #{tpu_custom_call.1}
  #allocation0 [shape = 'u32[]', space=smem, size = 0x4, offset = 0x4, fixed_abs, tag = 'smem constant byte address 0x4 - core index']
  #allocation1 [shape = 'u32[144,128]{1,0:T(1,128)}', space=vmem, size = 0x12000, scoped, tag = 'internal scratch']
  #allocation2 [shape = 'f32[128,36]{1,0:T(8,128)}', space=vmem, size = 0x10000, scoped, tag = 'scratch operand']
  %s0 = inlined_call_operand.vmem [shape: f32[2,18,18,4], index: 0, kind: input, shape index: {}]
  %s1 = inlined_call_operand.vmem [shape: f32[36,8], index: 1, kind: input, shape index: {}]
  %s2 = inlined_call_operand.hbm [shape: f32[2,2,2,8], index: 2, kind: output, shape index: {}]
  %s3 = sld [smem:[#allocation0]]
  $region41: #{tpu_custom_call.1} parent=0
    _
  %s5 = ssub.s32 1, %s3
  %s6 = scalar_select 0, %s5, %s3
  $region1: #{tpu_custom_call.1} parent=0
    #allocation3 [shape = 'u8[2048]{0}', space=vmem, size = 0x800, scoped, tag = 'output window, operand 0']
    #allocation4 [shape = 's32[2]{0}', space=sflag, size = 0x8, scoped, tag = 'scoped memory for tpu_custom_call.1']
    %7 = vsyncpa [#allocation4], 0
    %s8 = scalar_lea.sflag [#allocation4], 1
    %9 = vsyncpa %s8, 0
    loop: start=0, step=1, limit=6
    $region2: #{tpu_custom_call.1} parent=1 // loop_pre_header
      _
    $region3: #{tpu_custom_call.1} parent=1 // loop_header
      %s11 = sphi 0, %s15
      %p12 = scmp.ge.s32.totalorder %s11, 6
      %s18 = sphi 0, %s30
      %s19 = sphi 0, %s26
      %s20 = sphi 0, %s18
      %s21 = sphi 0, %s19
      %s22 = sphi 0, %s20
      %s23 = sphi 0, %s21
      %s33 = sphi 0, %s35
      %s36 = sphi 0, %s33
      %s37 = sphi 0, %s36
      %s53 = sphi 0, %s37
      %s57 = sphi 0, %s57
      %s59 = sphi 0, %s57
      %s60 = sphi 0, %s59
      %s74 = sphi 0, %s60
      %s82 = sphi 0, %s84
      %s85 = sphi 0, %s82
      %s86 = sphi 0, %s85
      %s102 = sphi 0, %s86
    $region4: #{tpu_custom_call.1} parent=1 // loop_header_branch
      %14 = sbr.rel (%p12) target = $region8
    $region5: #{tpu_custom_call.1} parent=1 // loop_body
      %s16 = ssub.s32 %s11, 1
      %s17 = ssub.s32 %s11, 2
      %s24 = sadd.s32 1, %s19
      %p25 = scmp.ge.s32.totalorder %s24, 2
      %s26 = scalar_select %p25, 0, %s24
      %s27 = sadd.s32 1, %s18
      %s28 = scalar_select %p25, %s27, %s18
      %p29 = scmp.ge.s32.totalorder %s28, 2
      %s30 = scalar_select %p29, 0, %s28
      %s31 = ssub.s32 %s18, %s30
      %p32 = scmp.eq.s32.totalorder %s31, 0
      %s34 = sadd.s32 %s33, 1
      %s35 = scalar_select %p32, %s33, %s34
      %p38 = pneg %p32
      %p39 = scmp.eq.s32.totalorder %s11, 3
      %p40 = por %p38, %p39
      %p41 = scmp.ne.s32.totalorder %s33, %s36
      %p42 = scmp.eq.s32.totalorder %s11, 0
      %p43 = por %p41, %p42
      %p44 = scmp.ne.s32.totalorder %s33, %s36
      %p45 = scmp.eq.s32.totalorder %s16, 3
      %p46 = por %p44, %p45
      %p47 = scmp.ne.s32.totalorder %s36, %s37
      %p48 = scmp.eq.s32.totalorder %s16, 0
      %p49 = por %p47, %p48
      %p50 = scmp.ne.s32.totalorder %s36, %s37
      %p51 = scmp.eq.s32.totalorder %s17, 3
      %p52 = por %p50, %p51
      %p54 = scmp.ne.s32.totalorder %s37, %s53
      %p55 = scmp.eq.s32.totalorder %s17, 0
      %p56 = por %p54, %p55
      %s58 = sadd.s32 %s57, 1
      %p61 = scmp.eq.s32.totalorder %s11, 3
      %p62 = scmp.ne.s32.totalorder %s57, %s59
      %p63 = scmp.eq.s32.totalorder %s11, 0
      %p64 = por %p62, %p63
      %p65 = scmp.ne.s32.totalorder %s57, %s59
      %p66 = scmp.eq.s32.totalorder %s16, 3
      %p67 = por %p65, %p66
      %p68 = scmp.ne.s32.totalorder %s59, %s60
      %p69 = scmp.eq.s32.totalorder %s16, 0
      %p70 = por %p68, %p69
      %p71 = scmp.ne.s32.totalorder %s59, %s60
      %p72 = scmp.eq.s32.totalorder %s17, 3
      %p73 = por %p71, %p72
      %p75 = scmp.ne.s32.totalorder %s60, %s74
      %p76 = scmp.eq.s32.totalorder %s17, 0
      %p77 = por %p75, %p76
      %s78 = ssub.s32 %s18, %s30
      %s79 = ssub.s32 %s19, %s26
      %s80 = sor.u32 %s78, %s79
      %p81 = scmp.eq.s32.totalorder %s80, 0
      %s83 = sadd.s32 %s82, 1
      %s84 = scalar_select %p81, %s82, %s83
      %p87 = pneg %p81
      %p88 = scmp.eq.s32.totalorder %s11, 3
      %p89 = por %p87, %p88
      %p90 = scmp.ne.s32.totalorder %s82, %s85
      %p91 = scmp.eq.s32.totalorder %s11, 0
      %p92 = por %p90, %p91
      %p93 = scmp.ne.s32.totalorder %s82, %s85
      %p94 = scmp.eq.s32.totalorder %s16, 3
      %p95 = por %p93, %p94
      %p96 = scmp.ne.s32.totalorder %s85, %s86
      %p97 = scmp.eq.s32.totalorder %s16, 0
      %p98 = por %p96, %p97
      %p99 = scmp.ne.s32.totalorder %s85, %s86
      %p100 = scmp.eq.s32.totalorder %s17, 3
      %p101 = por %p99, %p100
      %p103 = scmp.ne.s32.totalorder %s86, %s102
      %p104 = scmp.eq.s32.totalorder %s17, 0
      %p105 = por %p103, %p104
      %p106 = scmp.le.s32.totalorder 1, %s11
      %p107 = scmp.lt.s32.totalorder %s11, 5
      %p108 = pnand %p106, %p107
      %p109 = pneg %p108
      // Predicated region
      $region9: #{tpu_custom_call.1} parent=5 // pred_check
        _
      $region10: #{tpu_custom_call.1} parent=5 // pred_check_branch
        %111 = sbr.rel (%p108) target = $region12
      $region11: #{tpu_custom_call.1} parent=5 // pred_region
        %s112 = ssub.s32 %s11, 1
        // Predicated region
        $region13: #{tpu_custom_call.1} parent=11 // pred_check
          %p113 = pneg %p70
        $region14: #{tpu_custom_call.1} parent=11 // pred_check_branch
          %115 = sbr.rel (%p113) target = $region16
        $region15: #{tpu_custom_call.1} parent=11 // pred_region
          _
        $region16: #{tpu_custom_call.1} parent=11 // pred_fallthru
          _
      $region12: #{tpu_custom_call.1} parent=5 // pred_fallthru
        _
      %p116 = scmp.lt.s32.totalorder %s11, 4
      // Predicated region
      $region17: #{tpu_custom_call.1} parent=5 // pred_check
        %p117 = pneg %p116
      $region18: #{tpu_custom_call.1} parent=5 // pred_check_branch
        %119 = sbr.rel (%p117) target = $region20
      $region19: #{tpu_custom_call.1} parent=5 // pred_region
        // Predicated region
        $region21: #{tpu_custom_call.1} parent=19 // pred_check
          %p120 = pneg %p43
        $region22: #{tpu_custom_call.1} parent=19 // pred_check_branch
          %122 = sbr.rel (%p120) target = $region24
        $region23: #{tpu_custom_call.1} parent=19 // pred_region
          %p123 = scmp.lt.s32.totalorder %s18, 1
          %s124 = scalar_select %p123, %s18, 1
          %s125 = smul.addr %s124, 54
          %s126 = smul.addr %s125, 8
          %s127 = scalar_lea.vmem %s0, %s126
        $region24: #{tpu_custom_call.1} parent=19 // pred_fallthru
          _
      $region20: #{tpu_custom_call.1} parent=5 // pred_fallthru
        _
      %p128 = scmp.le.s32.totalorder 1, %s11
      %p129 = scmp.lt.s32.totalorder %s11, 5
      %p130 = pnand %p128, %p129
      %p131 = pneg %p130
      // Predicated region
      $region25: #{tpu_custom_call.1} parent=5 // pred_check
        _
      $region26: #{tpu_custom_call.1} parent=5 // pred_check_branch
        %133 = sbr.rel (%p130) target = $region28
      $region27: #{tpu_custom_call.1} parent=5 // pred_region
        %s134 = ssub.s32 %s11, 1
        %p135 = scmp.lt.s32.totalorder %s20, 1
        %s136 = scalar_select %p135, %s20, 1
        %s137 = smul.addr %s136, 54
        %s138 = smul.addr %s137, 8
        %s139 = scalar_lea.vmem %s0, %s138
        %p140 = pneg %p49
        %p141 = pneg %p46
        %p142 = pneg %p70
        %p143 = pneg %p67
        %p144 = pneg %p98
        %p145 = pneg %p95
        %s146 = sand.u32 %s85, 1
        %s147 = scalar_lea.sflag [#allocation4], %s146
        %s148 = sand.u32 %s85, 1
        %s149 = smul.addr %s148, 2
        %s150 = scalar_lea.vmem [#allocation3], %s149
        %p151 = scmp.lt.s32.totalorder %s20, 1
        %s152 = scalar_select %p151, %s20, 1
        %s153 = smul.addr %s152, 54
        %s154 = smul.addr %s153, 8
        %s155 = scalar_lea.vmem %s0, %s154
        %s156 = smul.u32 %s21, 8
        %s157 = smul.u32 %s156, 24
        %s158 = scalar_lea.vmem %s155, %s157
        %v159 = vld [vmem:[%s158] sm:$0xff]
        %v160 = vld [vmem:[%s158 + $0x8] sm:$0xff]
        %v161 = vld [vmem:[%s158 + $0x18] sm:$0xff]
        %v162 = vld [vmem:[%s158 + $0x20] sm:$0xff]
        %v163 = vld [vmem:[%s158 + $0x30] sm:$0xff]
        %v164 = vld [vmem:[%s158 + $0x38] sm:$0xff]
        %v165 = vld [vmem:[%s158 + $0x48] sm:$0xff]
        %v166 = vld [vmem:[%s158 + $0x50] sm:$0xff]
        %v167 = vld [vmem:[%s158 + $0x60] sm:$0xff]
        %v168 = vld [vmem:[%s158 + $0x68] sm:$0xff]
        %v169 = vld [vmem:[%s158 + $0x78] sm:$0xff]
        %v170 = vld [vmem:[%s158 + $0x80] sm:$0xff]
        %v171 = vld [vmem:[%s158 + $0x90] sm:$0xff]
        %v172 = vld [vmem:[%s158 + $0x98] sm:$0xff]
        %v173 = vld [vmem:[%s158 + $0xa8] sm:$0xff]
        %v174 = vld [vmem:[%s158 + $0xb0] sm:$0xff]
        %vm175 = vcmask 31744
        %176 = vst.msk [vmem:[#allocation2] sm:$0xff] %vm175, %v159
        %177 = vst.msk [vmem:[#allocation2 + $0x8] sm:$0xff] %vm175, %v160
        %178 = vst.msk [vmem:[#allocation2 + $0x10] sm:$0xff] %vm175, %v161
        %179 = vst.msk [vmem:[#allocation2 + $0x18] sm:$0xff] %vm175, %v162
        %180 = vst.msk [vmem:[#allocation2 + $0x20] sm:$0xff] %vm175, %v163
        %181 = vst.msk [vmem:[#allocation2 + $0x28] sm:$0xff] %vm175, %v164
        %182 = vst.msk [vmem:[#allocation2 + $0x30] sm:$0xff] %vm175, %v165
        %183 = vst.msk [vmem:[#allocation2 + $0x38] sm:$0xff] %vm175, %v166
        %184 = vst.msk [vmem:[#allocation2 + $0x40] sm:$0xff] %vm175, %v167
        %185 = vst.msk [vmem:[#allocation2 + $0x48] sm:$0xff] %vm175, %v168
        %186 = vst.msk [vmem:[#allocation2 + $0x50] sm:$0xff] %vm175, %v169
        %187 = vst.msk [vmem:[#allocation2 + $0x58] sm:$0xff] %vm175, %v170
        %188 = vst.msk [vmem:[#allocation2 + $0x60] sm:$0xff] %vm175, %v171
        %189 = vst.msk [vmem:[#allocation2 + $0x68] sm:$0xff] %vm175, %v172
        %190 = vst.msk [vmem:[#allocation2 + $0x70] sm:$0xff] %vm175, %v173
        %191 = vst.msk [vmem:[#allocation2 + $0x78] sm:$0xff] %vm175, %v174
        %v192 = vld [vmem:[%s158 + $0x1] sm:$0xff]
        %v193 = vld [vmem:[%s158 + $0x9] sm:$0xff]
        %v194 = vld [vmem:[%s158 + $0x19] sm:$0xff]
        %v195 = vld [vmem:[%s158 + $0x21] sm:$0xff]
        %v196 = vld [vmem:[%s158 + $0x31] sm:$0xff]
        %v197 = vld [vmem:[%s158 + $0x39] sm:$0xff]
        %v198 = vld [vmem:[%s158 + $0x49] sm:$0xff]
        %v199 = vld [vmem:[%s158 + $0x51] sm:$0xff]
        %v200 = vld [vmem:[%s158 + $0x61] sm:$0xff]
        %v201 = vld [vmem:[%s158 + $0x69] sm:$0xff]
        %v202 = vld [vmem:[%s158 + $0x79] sm:$0xff]
        %v203 = vld [vmem:[%s158 + $0x81] sm:$0xff]
        %v204 = vld [vmem:[%s158 + $0x91] sm:$0xff]
        %v205 = vld [vmem:[%s158 + $0x99] sm:$0xff]
        %v206 = vld [vmem:[%s158 + $0xa9] sm:$0xff]
        %v207 = vld [vmem:[%s158 + $0xb1] sm:$0xff]
        %224 = vrot.lane.b32.xlu0 %v192, 4
        %v225 = vpop.permute.xlu0 %224
        %226 = vrot.lane.b32.xlu0 %v193, 4
        %v227 = vpop.permute.xlu0 %226
        %228 = vrot.lane.b32.xlu0 %v194, 4
        %v229 = vpop.permute.xlu0 %228
        %230 = vrot.lane.b32.xlu0 %v195, 4
        %v231 = vpop.permute.xlu0 %230
        %232 = vrot.lane.b32.xlu0 %v196, 4
        %v233 = vpop.permute.xlu0 %232
        %234 = vrot.lane.b32.xlu0 %v197, 4
        %v235 = vpop.permute.xlu0 %234
        %236 = vrot.lane.b32.xlu0 %v198, 4
        %v237 = vpop.permute.xlu0 %236
        %238 = vrot.lane.b32.xlu0 %v199, 4
        %v239 = vpop.permute.xlu0 %238
        %240 = vrot.lane.b32.xlu0 %v200, 4
        %v241 = vpop.permute.xlu0 %240
        %242 = vrot.lane.b32.xlu0 %v201, 4
        %v243 = vpop.permute.xlu0 %242
        %244 = vrot.lane.b32.xlu0 %v202, 4
        %v245 = vpop.permute.xlu0 %244
        %246 = vrot.lane.b32.xlu0 %v203, 4
        %v247 = vpop.permute.xlu0 %246
        %248 = vrot.lane.b32.xlu0 %v204, 4
        %v249 = vpop.permute.xlu0 %248
        %250 = vrot.lane.b32.xlu0 %v205, 4
        %v251 = vpop.permute.xlu0 %250
        %252 = vrot.lane.b32.xlu0 %v206, 4
        %v253 = vpop.permute.xlu0 %252
        %254 = vrot.lane.b32.xlu0 %v207, 4
        %v255 = vpop.permute.xlu0 %254
        %vm272 = vcmask 64544
        %273 = vst.msk [vmem:[#allocation2] sm:$0xff] %vm272, %v225
        %274 = vst.msk [vmem:[#allocation2 + $0x8] sm:$0xff] %vm272, %v227
        %275 = vst.msk [vmem:[#allocation2 + $0x10] sm:$0xff] %vm272, %v229
        %276 = vst.msk [vmem:[#allocation2 + $0x18] sm:$0xff] %vm272, %v231
        %277 = vst.msk [vmem:[#allocation2 + $0x20] sm:$0xff] %vm272, %v233
        %278 = vst.msk [vmem:[#allocation2 + $0x28] sm:$0xff] %vm272, %v235
        %279 = vst.msk [vmem:[#allocation2 + $0x30] sm:$0xff] %vm272, %v237
        %280 = vst.msk [vmem:[#allocation2 + $0x38] sm:$0xff] %vm272, %v239
        %281 = vst.msk [vmem:[#allocation2 + $0x40] sm:$0xff] %vm272, %v241
        %282 = vst.msk [vmem:[#allocation2 + $0x48] sm:$0xff] %vm272, %v243
        %283 = vst.msk [vmem:[#allocation2 + $0x50] sm:$0xff] %vm272, %v245
        %284 = vst.msk [vmem:[#allocation2 + $0x58] sm:$0xff] %vm272, %v247
        %285 = vst.msk [vmem:[#allocation2 + $0x60] sm:$0xff] %vm272, %v249
        %286 = vst.msk [vmem:[#allocation2 + $0x68] sm:$0xff] %vm272, %v251
        %287 = vst.msk [vmem:[#allocation2 + $0x70] sm:$0xff] %vm272, %v253
        %288 = vst.msk [vmem:[#allocation2 + $0x78] sm:$0xff] %vm272, %v255
        %v289 = vld [vmem:[%s158 + $0x2] sm:$0xff]
        %v290 = vld [vmem:[%s158 + $0xa] sm:$0xff]
        %v291 = vld [vmem:[%s158 + $0x1a] sm:$0xff]
        %v292 = vld [vmem:[%s158 + $0x22] sm:$0xff]
        %v293 = vld [vmem:[%s158 + $0x32] sm:$0xff]
        %v294 = vld [vmem:[%s158 + $0x3a] sm:$0xff]
        %v295 = vld [vmem:[%s158 + $0x4a] sm:$0xff]
        %v296 = vld [vmem:[%s158 + $0x52] sm:$0xff]
        %v297 = vld [vmem:[%s158 + $0x62] sm:$0xff]
        %v298 = vld [vmem:[%s158 + $0x6a] sm:$0xff]
        %v299 = vld [vmem:[%s158 + $0x7a] sm:$0xff]
        %v300 = vld [vmem:[%s158 + $0x82] sm:$0xff]
        %v301 = vld [vmem:[%s158 + $0x92] sm:$0xff]
        %v302 = vld [vmem:[%s158 + $0x9a] sm:$0xff]
        %v303 = vld [vmem:[%s158 + $0xaa] sm:$0xff]
        %v304 = vld [vmem:[%s158 + $0xb2] sm:$0xff]
        %321 = vrot.lane.b32.xlu0 %v289, 8
        %v322 = vpop.permute.xlu0 %321
        %323 = vrot.lane.b32.xlu0 %v290, 8
        %v324 = vpop.permute.xlu0 %323
        %325 = vrot.lane.b32.xlu0 %v291, 8
        %v326 = vpop.permute.xlu0 %325
        %327 = vrot.lane.b32.xlu0 %v292, 8
        %v328 = vpop.permute.xlu0 %327
        %329 = vrot.lane.b32.xlu0 %v293, 8
        %v330 = vpop.permute.xlu0 %329
        %331 = vrot.lane.b32.xlu0 %v294, 8
        %v332 = vpop.permute.xlu0 %331
        %333 = vrot.lane.b32.xlu0 %v295, 8
        %v334 = vpop.permute.xlu0 %333
        %335 = vrot.lane.b32.xlu0 %v296, 8
        %v336 = vpop.permute.xlu0 %335
        %337 = vrot.lane.b32.xlu0 %v297, 8
        %v338 = vpop.permute.xlu0 %337
        %339 = vrot.lane.b32.xlu0 %v298, 8
        %v340 = vpop.permute.xlu0 %339
        %341 = vrot.lane.b32.xlu0 %v299, 8
        %v342 = vpop.permute.xlu0 %341
        %343 = vrot.lane.b32.xlu0 %v300, 8
        %v344 = vpop.permute.xlu0 %343
        %345 = vrot.lane.b32.xlu0 %v301, 8
        %v346 = vpop.permute.xlu0 %345
        %347 = vrot.lane.b32.xlu0 %v302, 8
        %v348 = vpop.permute.xlu0 %347
        %349 = vrot.lane.b32.xlu0 %v303, 8
        %v350 = vpop.permute.xlu0 %349
        %351 = vrot.lane.b32.xlu0 %v304, 8
        %v352 = vpop.permute.xlu0 %351
        %vm369 = vcmask 97344
        %370 = vst.msk [vmem:[#allocation2] sm:$0xff] %vm369, %v322
        %371 = vst.msk [vmem:[#allocation2 + $0x8] sm:$0xff] %vm369, %v324
        %372 = vst.msk [vmem:[#allocation2 + $0x10] sm:$0xff] %vm369, %v326
        %373 = vst.msk [vmem:[#allocation2 + $0x18] sm:$0xff] %vm369, %v328
        %374 = vst.msk [vmem:[#allocation2 + $0x20] sm:$0xff] %vm369, %v330
        %375 = vst.msk [vmem:[#allocation2 + $0x28] sm:$0xff] %vm369, %v332
        %376 = vst.msk [vmem:[#allocation2 + $0x30] sm:$0xff] %vm369, %v334
        %377 = vst.msk [vmem:[#allocation2 + $0x38] sm:$0xff] %vm369, %v336
        %378 = vst.msk [vmem:[#allocation2 + $0x40] sm:$0xff] %vm369, %v338
        %379 = vst.msk [vmem:[#allocation2 + $0x48] sm:$0xff] %vm369, %v340
        %380 = vst.msk [vmem:[#allocation2 + $0x50] sm:$0xff] %vm369, %v342
        %381 = vst.msk [vmem:[#allocation2 + $0x58] sm:$0xff] %vm369, %v344
        %382 = vst.msk [vmem:[#allocation2 + $0x60] sm:$0xff] %vm369, %v346
        %383 = vst.msk [vmem:[#allocation2 + $0x68] sm:$0xff] %vm369, %v348
        %384 = vst.msk [vmem:[#allocation2 + $0x70] sm:$0xff] %vm369, %v350
        %385 = vst.msk [vmem:[#allocation2 + $0x78] sm:$0xff] %vm369, %v352
        %s386 = sadd.s32 %s156, 1
        %s387 = smul.u32 %s386, 24
        %s388 = scalar_lea.vmem %s155, %s387
        %v389 = vld [vmem:[%s388] sm:$0xff]
        %v390 = vld [vmem:[%s388 + $0x8] sm:$0xff]
        %v391 = vld [vmem:[%s388 + $0x18] sm:$0xff]
        %v392 = vld [vmem:[%s388 + $0x20] sm:$0xff]
        %v393 = vld [vmem:[%s388 + $0x30] sm:$0xff]
        %v394 = vld [vmem:[%s388 + $0x38] sm:$0xff]
        %v395 = vld [vmem:[%s388 + $0x48] sm:$0xff]
        %v396 = vld [vmem:[%s388 + $0x50] sm:$0xff]
        %v397 = vld [vmem:[%s388 + $0x60] sm:$0xff]
        %v398 = vld [vmem:[%s388 + $0x68] sm:$0xff]
        %v399 = vld [vmem:[%s388 + $0x78] sm:$0xff]
        %v400 = vld [vmem:[%s388 + $0x80] sm:$0xff]
        %v401 = vld [vmem:[%s388 + $0x90] sm:$0xff]
        %v402 = vld [vmem:[%s388 + $0x98] sm:$0xff]
        %v403 = vld [vmem:[%s388 + $0xa8] sm:$0xff]
        %v404 = vld [vmem:[%s388 + $0xb0] sm:$0xff]
        %421 = vrot.lane.b32.xlu0 %v389, 12
        %v422 = vpop.permute.xlu0 %421
        %423 = vrot.lane.b32.xlu0 %v390, 12
        %v424 = vpop.permute.xlu0 %423
        %425 = vrot.lane.b32.xlu0 %v391, 12
        %v426 = vpop.permute.xlu0 %425
        %427 = vrot.lane.b32.xlu0 %v392, 12
        %v428 = vpop.permute.xlu0 %427
        %429 = vrot.lane.b32.xlu0 %v393, 12
        %v430 = vpop.permute.xlu0 %429
        %431 = vrot.lane.b32.xlu0 %v394, 12
        %v432 = vpop.permute.xlu0 %431
        %433 = vrot.lane.b32.xlu0 %v395, 12
        %v434 = vpop.permute.xlu0 %433
        %435 = vrot.lane.b32.xlu0 %v396, 12
        %v436 = vpop.permute.xlu0 %435
        %437 = vrot.lane.b32.xlu0 %v397, 12
        %v438 = vpop.permute.xlu0 %437
        %439 = vrot.lane.b32.xlu0 %v398, 12
        %v440 = vpop.permute.xlu0 %439
        %441 = vrot.lane.b32.xlu0 %v399, 12
        %v442 = vpop.permute.xlu0 %441
        %443 = vrot.lane.b32.xlu0 %v400, 12
        %v444 = vpop.permute.xlu0 %443
        %445 = vrot.lane.b32.xlu0 %v401, 12
        %v446 = vpop.permute.xlu0 %445
        %447 = vrot.lane.b32.xlu0 %v402, 12
        %v448 = vpop.permute.xlu0 %447
        %449 = vrot.lane.b32.xlu0 %v403, 12
        %v450 = vpop.permute.xlu0 %449
        %451 = vrot.lane.b32.xlu0 %v404, 12
        %v452 = vpop.permute.xlu0 %451
        %vm469 = vcmask 130144
        %470 = vst.msk [vmem:[#allocation2] sm:$0xff] %vm469, %v422
        %471 = vst.msk [vmem:[#allocation2 + $0x8] sm:$0xff] %vm469, %v424
        %472 = vst.msk [vmem:[#allocation2 + $0x10] sm:$0xff] %vm469, %v426
        %473 = vst.msk [vmem:[#allocation2 + $0x18] sm:$0xff] %vm469, %v428
        %474 = vst.msk [vmem:[#allocation2 + $0x20] sm:$0xff] %vm469, %v430
        %475 = vst.msk [vmem:[#allocation2 + $0x28] sm:$0xff] %vm469, %v432
        %476 = vst.msk [vmem:[#allocation2 + $0x30] sm:$0xff] %vm469, %v434
        %477 = vst.msk [vmem:[#allocation2 + $0x38] sm:$0xff] %vm469, %v436
        %478 = vst.msk [vmem:[#allocation2 + $0x40] sm:$0xff] %vm469, %v438
        %479 = vst.msk [vmem:[#allocation2 + $0x48] sm:$0xff] %vm469, %v440
        %480 = vst.msk [vmem:[#allocation2 + $0x50] sm:$0xff] %vm469, %v442
        %481 = vst.msk [vmem:[#allocation2 + $0x58] sm:$0xff] %vm469, %v444
        %482 = vst.msk [vmem:[#allocation2 + $0x60] sm:$0xff] %vm469, %v446
        %483 = vst.msk [vmem:[#allocation2 + $0x68] sm:$0xff] %vm469, %v448
        %484 = vst.msk [vmem:[#allocation2 + $0x70] sm:$0xff] %vm469, %v450
        %485 = vst.msk [vmem:[#allocation2 + $0x78] sm:$0xff] %vm469, %v452
        %v486 = vld [vmem:[%s388 + $0x1] sm:$0xff]
        %v487 = vld [vmem:[%s388 + $0x9] sm:$0xff]
        %v488 = vld [vmem:[%s388 + $0x19] sm:$0xff]
        %v489 = vld [vmem:[%s388 + $0x21] sm:$0xff]
        %v490 = vld [vmem:[%s388 + $0x31] sm:$0xff]
        %v491 = vld [vmem:[%s388 + $0x39] sm:$0xff]
        %v492 = vld [vmem:[%s388 + $0x49] sm:$0xff]
        %v493 = vld [vmem:[%s388 + $0x51] sm:$0xff]
        %v494 = vld [vmem:[%s388 + $0x61] sm:$0xff]
        %v495 = vld [vmem:[%s388 + $0x69] sm:$0xff]
        %v496 = vld [vmem:[%s388 + $0x79] sm:$0xff]
        %v497 = vld [vmem:[%s388 + $0x81] sm:$0xff]
        %v498 = vld [vmem:[%s388 + $0x91] sm:$0xff]
        %v499 = vld [vmem:[%s388 + $0x99] sm:$0xff]
        %v500 = vld [vmem:[%s388 + $0xa9] sm:$0xff]
        %v501 = vld [vmem:[%s388 + $0xb1] sm:$0xff]
        %518 = vrot.lane.b32.xlu0 %v486, 16
        %v519 = vpop.permute.xlu0 %518
        %520 = vrot.lane.b32.xlu0 %v487, 16
        %v521 = vpop.permute.xlu0 %520
        %522 = vrot.lane.b32.xlu0 %v488, 16
        %v523 = vpop.permute.xlu0 %522
        %524 = vrot.lane.b32.xlu0 %v489, 16
        %v525 = vpop.permute.xlu0 %524
        %526 = vrot.lane.b32.xlu0 %v490, 16
        %v527 = vpop.permute.xlu0 %526
        %528 = vrot.lane.b32.xlu0 %v491, 16
        %v529 = vpop.permute.xlu0 %528
        %530 = vrot.lane.b32.xlu0 %v492, 16
        %v531 = vpop.permute.xlu0 %530
        %532 = vrot.lane.b32.xlu0 %v493, 16
        %v533 = vpop.permute.xlu0 %532
        %534 = vrot.lane.b32.xlu0 %v494, 16
        %v535 = vpop.permute.xlu0 %534
        %536 = vrot.lane.b32.xlu0 %v495, 16
        %v537 = vpop.permute.xlu0 %536
        %538 = vrot.lane.b32.xlu0 %v496, 16
        %v539 = vpop.permute.xlu0 %538
        %540 = vrot.lane.b32.xlu0 %v497, 16
        %v541 = vpop.permute.xlu0 %540
        %542 = vrot.lane.b32.xlu0 %v498, 16
        %v543 = vpop.permute.xlu0 %542
        %544 = vrot.lane.b32.xlu0 %v499, 16
        %v545 = vpop.permute.xlu0 %544
        %546 = vrot.lane.b32.xlu0 %v500, 16
        %v547 = vpop.permute.xlu0 %546
        %548 = vrot.lane.b32.xlu0 %v501, 16
        %v549 = vpop.permute.xlu0 %548
        %vm566 = vcmask 162944
        %567 = vst.msk [vmem:[#allocation2] sm:$0xff] %vm566, %v519
        %568 = vst.msk [vmem:[#allocation2 + $0x8] sm:$0xff] %vm566, %v521
        %569 = vst.msk [vmem:[#allocation2 + $0x10] sm:$0xff] %vm566, %v523
        %570 = vst.msk [vmem:[#allocation2 + $0x18] sm:$0xff] %vm566, %v525
        %571 = vst.msk [vmem:[#allocation2 + $0x20] sm:$0xff] %vm566, %v527
        %572 = vst.msk [vmem:[#allocation2 + $0x28] sm:$0xff] %vm566, %v529
        %573 = vst.msk [vmem:[#allocation2 + $0x30] sm:$0xff] %vm566, %v531
        %574 = vst.msk [vmem:[#allocation2 + $0x38] sm:$0xff] %vm566, %v533
        %575 = vst.msk [vmem:[#allocation2 + $0x40] sm:$0xff] %vm566, %v535
        %576 = vst.msk [vmem:[#allocation2 + $0x48] sm:$0xff] %vm566, %v537
        %577 = vst.msk [vmem:[#allocation2 + $0x50] sm:$0xff] %vm566, %v539
        %578 = vst.msk [vmem:[#allocation2 + $0x58] sm:$0xff] %vm566, %v541
        %579 = vst.msk [vmem:[#allocation2 + $0x60] sm:$0xff] %vm566, %v543
        %580 = vst.msk [vmem:[#allocation2 + $0x68] sm:$0xff] %vm566, %v545
        %581 = vst.msk [vmem:[#allocation2 + $0x70] sm:$0xff] %vm566, %v547
        %582 = vst.msk [vmem:[#allocation2 + $0x78] sm:$0xff] %vm566, %v549
        %v583 = vld [vmem:[%s388 + $0x2] sm:$0xff]
        %v584 = vld [vmem:[%s388 + $0xa] sm:$0xff]
        %v585 = vld [vmem:[%s388 + $0x1a] sm:$0xff]
        %v586 = vld [vmem:[%s388 + $0x22] sm:$0xff]
        %v587 = vld [vmem:[%s388 + $0x32] sm:$0xff]
        %v588 = vld [vmem:[%s388 + $0x3a] sm:$0xff]
        %v589 = vld [vmem:[%s388 + $0x4a] sm:$0xff]
        %v590 = vld [vmem:[%s388 + $0x52] sm:$0xff]
        %v591 = vld [vmem:[%s388 + $0x62] sm:$0xff]
        %v592 = vld [vmem:[%s388 + $0x6a] sm:$0xff]
        %v593 = vld [vmem:[%s388 + $0x7a] sm:$0xff]
        %v594 = vld [vmem:[%s388 + $0x82] sm:$0xff]
        %v595 = vld [vmem:[%s388 + $0x92] sm:$0xff]
        %v596 = vld [vmem:[%s388 + $0x9a] sm:$0xff]
        %v597 = vld [vmem:[%s388 + $0xaa] sm:$0xff]
        %v598 = vld [vmem:[%s388 + $0xb2] sm:$0xff]
        %615 = vrot.lane.b32.xlu0 %v583, 20
        %v616 = vpop.permute.xlu0 %615
        %617 = vrot.lane.b32.xlu0 %v584, 20
        %v618 = vpop.permute.xlu0 %617
        %619 = vrot.lane.b32.xlu0 %v585, 20
        %v620 = vpop.permute.xlu0 %619
        %621 = vrot.lane.b32.xlu0 %v586, 20
        %v622 = vpop.permute.xlu0 %621
        %623 = vrot.lane.b32.xlu0 %v587, 20
        %v624 = vpop.permute.xlu0 %623
        %625 = vrot.lane.b32.xlu0 %v588, 20
        %v626 = vpop.permute.xlu0 %625
        %627 = vrot.lane.b32.xlu0 %v589, 20
        %v628 = vpop.permute.xlu0 %627
        %629 = vrot.lane.b32.xlu0 %v590, 20
        %v630 = vpop.permute.xlu0 %629
        %631 = vrot.lane.b32.xlu0 %v591, 20
        %v632 = vpop.permute.xlu0 %631
        %633 = vrot.lane.b32.xlu0 %v592, 20
        %v634 = vpop.permute.xlu0 %633
        %635 = vrot.lane.b32.xlu0 %v593, 20
        %v636 = vpop.permute.xlu0 %635
        %637 = vrot.lane.b32.xlu0 %v594, 20
        %v638 = vpop.permute.xlu0 %637
        %639 = vrot.lane.b32.xlu0 %v595, 20
        %v640 = vpop.permute.xlu0 %639
        %641 = vrot.lane.b32.xlu0 %v596, 20
        %v642 = vpop.permute.xlu0 %641
        %643 = vrot.lane.b32.xlu0 %v597, 20
        %v644 = vpop.permute.xlu0 %643
        %645 = vrot.lane.b32.xlu0 %v598, 20
        %v646 = vpop.permute.xlu0 %645
        %vm663 = vcmask 195744
        %664 = vst.msk [vmem:[#allocation2] sm:$0xff] %vm663, %v616
        %665 = vst.msk [vmem:[#allocation2 + $0x8] sm:$0xff] %vm663, %v618
        %666 = vst.msk [vmem:[#allocation2 + $0x10] sm:$0xff] %vm663, %v620
        %667 = vst.msk [vmem:[#allocation2 + $0x18] sm:$0xff] %vm663, %v622
        %668 = vst.msk [vmem:[#allocation2 + $0x20] sm:$0xff] %vm663, %v624
        %669 = vst.msk [vmem:[#allocation2 + $0x28] sm:$0xff] %vm663, %v626
        %670 = vst.msk [vmem:[#allocation2 + $0x30] sm:$0xff] %vm663, %v628
        %671 = vst.msk [vmem:[#allocation2 + $0x38] sm:$0xff] %vm663, %v630
        %672 = vst.msk [vmem:[#allocation2 + $0x40] sm:$0xff] %vm663, %v632
        %673 = vst.msk [vmem:[#allocation2 + $0x48] sm:$0xff] %vm663, %v634
        %674 = vst.msk [vmem:[#allocation2 + $0x50] sm:$0xff] %vm663, %v636
        %675 = vst.msk [vmem:[#allocation2 + $0x58] sm:$0xff] %vm663, %v638
        %676 = vst.msk [vmem:[#allocation2 + $0x60] sm:$0xff] %vm663, %v640
        %677 = vst.msk [vmem:[#allocation2 + $0x68] sm:$0xff] %vm663, %v642
        %678 = vst.msk [vmem:[#allocation2 + $0x70] sm:$0xff] %vm663, %v644
        %679 = vst.msk [vmem:[#allocation2 + $0x78] sm:$0xff] %vm663, %v646
        %s680 = sadd.s32 %s156, 2
        %s681 = smul.u32 %s680, 24
        %s682 = scalar_lea.vmem %s155, %s681
        %v683 = vld [vmem:[%s682] sm:$0xff]
        %v684 = vld [vmem:[%s682 + $0x8] sm:$0xff]
        %v685 = vld [vmem:[%s682 + $0x18] sm:$0xff]
        %v686 = vld [vmem:[%s682 + $0x20] sm:$0xff]
        %v687 = vld [vmem:[%s682 + $0x30] sm:$0xff]
        %v688 = vld [vmem:[%s682 + $0x38] sm:$0xff]
        %v689 = vld [vmem:[%s682 + $0x48] sm:$0xff]
        %v690 = vld [vmem:[%s682 + $0x50] sm:$0xff]
        %v691 = vld [vmem:[%s682 + $0x60] sm:$0xff]
        %v692 = vld [vmem:[%s682 + $0x68] sm:$0xff]
        %v693 = vld [vmem:[%s682 + $0x78] sm:$0xff]
        %v694 = vld [vmem:[%s682 + $0x80] sm:$0xff]
        %v695 = vld [vmem:[%s682 + $0x90] sm:$0xff]
        %v696 = vld [vmem:[%s682 + $0x98] sm:$0xff]
        %v697 = vld [vmem:[%s682 + $0xa8] sm:$0xff]
        %v698 = vld [vmem:[%s682 + $0xb0] sm:$0xff]
        %715 = vrot.lane.b32.xlu0 %v683, 24
        %v716 = vpop.permute.xlu0 %715
        %717 = vrot.lane.b32.xlu0 %v684, 24
        %v718 = vpop.permute.xlu0 %717
        %719 = vrot.lane.b32.xlu0 %v685, 24
        %v720 = vpop.permute.xlu0 %719
        %721 = vrot.lane.b32.xlu0 %v686, 24
        %v722 = vpop.permute.xlu0 %721
        %723 = vrot.lane.b32.xlu0 %v687, 24
        %v724 = vpop.permute.xlu0 %723
        %725 = vrot.lane.b32.xlu0 %v688, 24
        %v726 = vpop.permute.xlu0 %725
        %727 = vrot.lane.b32.xlu0 %v689, 24
        %v728 = vpop.permute.xlu0 %727
        %729 = vrot.lane.b32.xlu0 %v690, 24
        %v730 = vpop.permute.xlu0 %729
        %731 = vrot.lane.b32.xlu0 %v691, 24
        %v732 = vpop.permute.xlu0 %731
        %733 = vrot.lane.b32.xlu0 %v692, 24
        %v734 = vpop.permute.xlu0 %733
        %735 = vrot.lane.b32.xlu0 %v693, 24
        %v736 = vpop.permute.xlu0 %735
        %737 = vrot.lane.b32.xlu0 %v694, 24
        %v738 = vpop.permute.xlu0 %737
        %739 = vrot.lane.b32.xlu0 %v695, 24
        %v740 = vpop.permute.xlu0 %739
        %741 = vrot.lane.b32.xlu0 %v696, 24
        %v742 = vpop.permute.xlu0 %741
        %743 = vrot.lane.b32.xlu0 %v697, 24
        %v744 = vpop.permute.xlu0 %743
        %745 = vrot.lane.b32.xlu0 %v698, 24
        %v746 = vpop.permute.xlu0 %745
        %vm763 = vcmask 228544
        %764 = vst.msk [vmem:[#allocation2] sm:$0xff] %vm763, %v716
        %765 = vst.msk [vmem:[#allocation2 + $0x8] sm:$0xff] %vm763, %v718
        %766 = vst.msk [vmem:[#allocation2 + $0x10] sm:$0xff] %vm763, %v720
        %767 = vst.msk [vmem:[#allocation2 + $0x18] sm:$0xff] %vm763, %v722
        %768 = vst.msk [vmem:[#allocation2 + $0x20] sm:$0xff] %vm763, %v724
        %769 = vst.msk [vmem:[#allocation2 + $0x28] sm:$0xff] %vm763, %v726
        %770 = vst.msk [vmem:[#allocation2 + $0x30] sm:$0xff] %vm763, %v728
        %771 = vst.msk [vmem:[#allocation2 + $0x38] sm:$0xff] %vm763, %v730
        %772 = vst.msk [vmem:[#allocation2 + $0x40] sm:$0xff] %vm763, %v732
        %773 = vst.msk [vmem:[#allocation2 + $0x48] sm:$0xff] %vm763, %v734
        %774 = vst.msk [vmem:[#allocation2 + $0x50] sm:$0xff] %vm763, %v736
        %775 = vst.msk [vmem:[#allocation2 + $0x58] sm:$0xff] %vm763, %v738
        %776 = vst.msk [vmem:[#allocation2 + $0x60] sm:$0xff] %vm763, %v740
        %777 = vst.msk [vmem:[#allocation2 + $0x68] sm:$0xff] %vm763, %v742
        %778 = vst.msk [vmem:[#allocation2 + $0x70] sm:$0xff] %vm763, %v744
        %779 = vst.msk [vmem:[#allocation2 + $0x78] sm:$0xff] %vm763, %v746
        %v780 = vld [vmem:[%s682 + $0x1] sm:$0xff]
        %v781 = vld [vmem:[%s682 + $0x9] sm:$0xff]
        %v782 = vld [vmem:[%s682 + $0x19] sm:$0xff]
        %v783 = vld [vmem:[%s682 + $0x21] sm:$0xff]
        %v784 = vld [vmem:[%s682 + $0x31] sm:$0xff]
        %v785 = vld [vmem:[%s682 + $0x39] sm:$0xff]
        %v786 = vld [vmem:[%s682 + $0x49] sm:$0xff]
        %v787 = vld [vmem:[%s682 + $0x51] sm:$0xff]
        %v788 = vld [vmem:[%s682 + $0x61] sm:$0xff]
        %v789 = vld [vmem:[%s682 + $0x69] sm:$0xff]
        %v790 = vld [vmem:[%s682 + $0x79] sm:$0xff]
        %v791 = vld [vmem:[%s682 + $0x81] sm:$0xff]
        %v792 = vld [vmem:[%s682 + $0x91] sm:$0xff]
        %v793 = vld [vmem:[%s682 + $0x99] sm:$0xff]
        %v794 = vld [vmem:[%s682 + $0xa9] sm:$0xff]
        %v795 = vld [vmem:[%s682 + $0xb1] sm:$0xff]
        %812 = vrot.lane.b32.xlu0 %v780, 28
        %v813 = vpop.permute.xlu0 %812
        %814 = vrot.lane.b32.xlu0 %v781, 28
        %v815 = vpop.permute.xlu0 %814
        %816 = vrot.lane.b32.xlu0 %v782, 28
        %v817 = vpop.permute.xlu0 %816
        %818 = vrot.lane.b32.xlu0 %v783, 28
        %v819 = vpop.permute.xlu0 %818
        %820 = vrot.lane.b32.xlu0 %v784, 28
        %v821 = vpop.permute.xlu0 %820
        %822 = vrot.lane.b32.xlu0 %v785, 28
        %v823 = vpop.permute.xlu0 %822
        %824 = vrot.lane.b32.xlu0 %v786, 28
        %v825 = vpop.permute.xlu0 %824
        %826 = vrot.lane.b32.xlu0 %v787, 28
        %v827 = vpop.permute.xlu0 %826
        %828 = vrot.lane.b32.xlu0 %v788, 28
        %v829 = vpop.permute.xlu0 %828
        %830 = vrot.lane.b32.xlu0 %v789, 28
        %v831 = vpop.permute.xlu0 %830
        %832 = vrot.lane.b32.xlu0 %v790, 28
        %v833 = vpop.permute.xlu0 %832
        %834 = vrot.lane.b32.xlu0 %v791, 28
        %v835 = vpop.permute.xlu0 %834
        %836 = vrot.lane.b32.xlu0 %v792, 28
        %v837 = vpop.permute.xlu0 %836
        %838 = vrot.lane.b32.xlu0 %v793, 28
        %v839 = vpop.permute.xlu0 %838
        %840 = vrot.lane.b32.xlu0 %v794, 28
        %v841 = vpop.permute.xlu0 %840
        %842 = vrot.lane.b32.xlu0 %v795, 28
        %v843 = vpop.permute.xlu0 %842
        %vm860 = vcmask 261344
        %861 = vst.msk [vmem:[#allocation2] sm:$0xff] %vm860, %v813
        %862 = vst.msk [vmem:[#allocation2 + $0x8] sm:$0xff] %vm860, %v815
        %863 = vst.msk [vmem:[#allocation2 + $0x10] sm:$0xff] %vm860, %v817
        %864 = vst.msk [vmem:[#allocation2 + $0x18] sm:$0xff] %vm860, %v819
        %865 = vst.msk [vmem:[#allocation2 + $0x20] sm:$0xff] %vm860, %v821
        %866 = vst.msk [vmem:[#allocation2 + $0x28] sm:$0xff] %vm860, %v823
        %867 = vst.msk [vmem:[#allocation2 + $0x30] sm:$0xff] %vm860, %v825
        %868 = vst.msk [vmem:[#allocation2 + $0x38] sm:$0xff] %vm860, %v827
        %869 = vst.msk [vmem:[#allocation2 + $0x40] sm:$0xff] %vm860, %v829
        %870 = vst.msk [vmem:[#allocation2 + $0x48] sm:$0xff] %vm860, %v831
        %871 = vst.msk [vmem:[#allocation2 + $0x50] sm:$0xff] %vm860, %v833
        %872 = vst.msk [vmem:[#allocation2 + $0x58] sm:$0xff] %vm860, %v835
        %873 = vst.msk [vmem:[#allocation2 + $0x60] sm:$0xff] %vm860, %v837
        %874 = vst.msk [vmem:[#allocation2 + $0x68] sm:$0xff] %vm860, %v839
        %875 = vst.msk [vmem:[#allocation2 + $0x70] sm:$0xff] %vm860, %v841
        %876 = vst.msk [vmem:[#allocation2 + $0x78] sm:$0xff] %vm860, %v843
        %v877 = vld [vmem:[%s682 + $0x2] sm:$0xff]
        %v878 = vld [vmem:[%s682 + $0xa] sm:$0xff]
        %v879 = vld [vmem:[%s682 + $0x1a] sm:$0xff]
        %v880 = vld [vmem:[%s682 + $0x22] sm:$0xff]
        %v881 = vld [vmem:[%s682 + $0x32] sm:$0xff]
        %v882 = vld [vmem:[%s682 + $0x3a] sm:$0xff]
        %v883 = vld [vmem:[%s682 + $0x4a] sm:$0xff]
        %v884 = vld [vmem:[%s682 + $0x52] sm:$0xff]
        %v885 = vld [vmem:[%s682 + $0x62] sm:$0xff]
        %v886 = vld [vmem:[%s682 + $0x6a] sm:$0xff]
        %v887 = vld [vmem:[%s682 + $0x7a] sm:$0xff]
        %v888 = vld [vmem:[%s682 + $0x82] sm:$0xff]
        %v889 = vld [vmem:[%s682 + $0x92] sm:$0xff]
        %v890 = vld [vmem:[%s682 + $0x9a] sm:$0xff]
        %v891 = vld [vmem:[%s682 + $0xaa] sm:$0xff]
        %v892 = vld [vmem:[%s682 + $0xb2] sm:$0xff]
        %909 = vrot.lane.b32.xlu0 %v877, 32
        %v910 = vpop.permute.xlu0 %909
        %911 = vrot.lane.b32.xlu0 %v878, 32
        %v912 = vpop.permute.xlu0 %911
        %913 = vrot.lane.b32.xlu0 %v879, 32
        %v914 = vpop.permute.xlu0 %913
        %915 = vrot.lane.b32.xlu0 %v880, 32
        %v916 = vpop.permute.xlu0 %915
        %917 = vrot.lane.b32.xlu0 %v881, 32
        %v918 = vpop.permute.xlu0 %917
        %919 = vrot.lane.b32.xlu0 %v882, 32
        %v920 = vpop.permute.xlu0 %919
        %921 = vrot.lane.b32.xlu0 %v883, 32
        %v922 = vpop.permute.xlu0 %921
        %923 = vrot.lane.b32.xlu0 %v884, 32
        %v924 = vpop.permute.xlu0 %923
        %925 = vrot.lane.b32.xlu0 %v885, 32
        %v926 = vpop.permute.xlu0 %925
        %927 = vrot.lane.b32.xlu0 %v886, 32
        %v928 = vpop.permute.xlu0 %927
        %929 = vrot.lane.b32.xlu0 %v887, 32
        %v930 = vpop.permute.xlu0 %929
        %931 = vrot.lane.b32.xlu0 %v888, 32
        %v932 = vpop.permute.xlu0 %931
        %933 = vrot.lane.b32.xlu0 %v889, 32
        %v934 = vpop.permute.xlu0 %933
        %935 = vrot.lane.b32.xlu0 %v890, 32
        %v936 = vpop.permute.xlu0 %935
        %937 = vrot.lane.b32.xlu0 %v891, 32
        %v938 = vpop.permute.xlu0 %937
        %939 = vrot.lane.b32.xlu0 %v892, 32
        %v940 = vpop.permute.xlu0 %939
        %vm957 = vcmask 294144
        %958 = vst.msk [vmem:[#allocation2] sm:$0xff] %vm957, %v910
        %959 = vst.msk [vmem:[#allocation2 + $0x8] sm:$0xff] %vm957, %v912
        %960 = vst.msk [vmem:[#allocation2 + $0x10] sm:$0xff] %vm957, %v914
        %961 = vst.msk [vmem:[#allocation2 + $0x18] sm:$0xff] %vm957, %v916
        %962 = vst.msk [vmem:[#allocation2 + $0x20] sm:$0xff] %vm957, %v918
        %963 = vst.msk [vmem:[#allocation2 + $0x28] sm:$0xff] %vm957, %v920
        %964 = vst.msk [vmem:[#allocation2 + $0x30] sm:$0xff] %vm957, %v922
        %965 = vst.msk [vmem:[#allocation2 + $0x38] sm:$0xff] %vm957, %v924
        %966 = vst.msk [vmem:[#allocation2 + $0x40] sm:$0xff] %vm957, %v926
        %967 = vst.msk [vmem:[#allocation2 + $0x48] sm:$0xff] %vm957, %v928
        %968 = vst.msk [vmem:[#allocation2 + $0x50] sm:$0xff] %vm957, %v930
        %969 = vst.msk [vmem:[#allocation2 + $0x58] sm:$0xff] %vm957, %v932
        %970 = vst.msk [vmem:[#allocation2 + $0x60] sm:$0xff] %vm957, %v934
        %971 = vst.msk [vmem:[#allocation2 + $0x68] sm:$0xff] %vm957, %v936
        %972 = vst.msk [vmem:[#allocation2 + $0x70] sm:$0xff] %vm957, %v938
        %973 = vst.msk [vmem:[#allocation2 + $0x78] sm:$0xff] %vm957, %v940
        %v974 = vld [vmem:[#allocation2] sm:$0xff]
        %v975 = vld [vmem:[#allocation2 + $0x8] sm:$0xff]
        %v976 = vld [vmem:[#allocation2 + $0x10] sm:$0xff]
        %v977 = vld [vmem:[#allocation2 + $0x18] sm:$0xff]
        %v978 = vld [vmem:[#allocation2 + $0x20] sm:$0xff]
        %v979 = vld [vmem:[#allocation2 + $0x28] sm:$0xff]
        %v980 = vld [vmem:[#allocation2 + $0x30] sm:$0xff]
        %v981 = vld [vmem:[#allocation2 + $0x38] sm:$0xff]
        %v982 = vld [vmem:[#allocation2 + $0x40] sm:$0xff]
        %v983 = vld [vmem:[#allocation2 + $0x48] sm:$0xff]
        %v984 = vld [vmem:[#allocation2 + $0x50] sm:$0xff]
        %v985 = vld [vmem:[#allocation2 + $0x58] sm:$0xff]
        %v986 = vld [vmem:[#allocation2 + $0x60] sm:$0xff]
        %v987 = vld [vmem:[#allocation2 + $0x68] sm:$0xff]
        %v988 = vld [vmem:[#allocation2 + $0x70] sm:$0xff]
        %v989 = vld [vmem:[#allocation2 + $0x78] sm:$0xff]
        %v990 = vld [vmem:[%s1] sm:$0xff]
        %v991 = vld [vmem:[%s1 + $0x8] sm:$0xff]
        %v992 = vld [vmem:[%s1 + $0x10] sm:$0xff]
        %v993 = vld [vmem:[%s1 + $0x18] sm:$0xff]
        %v994 = vld [vmem:[%s1 + $0x20] sm:$0xf]
        %vm995 = vcmask 293888
        %v997 = vsel %vm995, %v974, 0
        %v1000 = vsel %vm995, %v975, 0
        %v1003 = vsel %vm995, %v976, 0
        %v1006 = vsel %vm995, %v977, 0
        %v1009 = vsel %vm995, %v978, 0
        %v1012 = vsel %vm995, %v979, 0
        %v1015 = vsel %vm995, %v980, 0
        %v1018 = vsel %vm995, %v981, 0
        %v1021 = vsel %vm995, %v982, 0
        %v1024 = vsel %vm995, %v983, 0
        %v1027 = vsel %vm995, %v984, 0
        %v1030 = vsel %vm995, %v985, 0
        %v1033 = vsel %vm995, %v986, 0
        %v1036 = vsel %vm995, %v987, 0
        %v1039 = vsel %vm995, %v988, 0
        %v1042 = vsel %vm995, %v989, 0
        %vm1044 = vcmask 1043456
        %v1046 = vsel %vm1044, %v994, 0
        %1048 = vmatprep.subr.mxu0 0.0
        %1049 = vmatpush1.msra.mxu0 0.0
        %1050 = vmatprep.subr.mxu0 0.0
        %1051 = vmatpush1.msra.mxu0 0.0
        %1052 = vmatprep.subr.mxu0 0.0
        %1053 = vmatpush1.msra.mxu0 0.0
        %1054 = vmatprep.subr.mxu0 0.0
        %1055 = vmatpush1.msra.mxu0 0.0
        %1056 = vmatprep.subr.mxu0 0.0
        %1057 = vmatpush1.msra.mxu0 0.0
        %1058 = vmatprep.subr.mxu0 0.0
        %1059 = vmatpush1.msra.mxu0 0.0
        %1060 = vmatprep.subr.mxu0 0.0
        %1061 = vmatpush1.msra.mxu0 0.0
        %1062 = vmatprep.subr.mxu0 0.0
        %1063 = vmatpush1.msra.mxu0 0.0
        %1064 = vmatprep.subr.mxu0 0.0
        %1065 = vmatpush1.msra.mxu0 0.0
        %1066 = vmatprep.subr.mxu0 0.0
        %1067 = vmatpush1.msra.mxu0 0.0
        %1068 = vmatprep.subr.mxu0 0.0
        %1069 = vmatpush1.msra.mxu0 0.0
        %1070 = vmatprep.subr.mxu0 0.0
        %1071 = vmatpush1.msra.mxu0 %v1046
        %1072 = vmatprep.subr.mxu0 0.0
        %1073 = vmatpush1.msra.mxu0 %v993
        %1074 = vmatprep.subr.mxu0 0.0
        %1075 = vmatpush1.msra.mxu0 %v992
        %1076 = vmatprep.subr.mxu0 0.0
        %1077 = vmatpush1.msra.mxu0 %v991
        %1078 = vmatprep.subr.mxu0 0.0
        %1079 = vmatpush1.msra.mxu0 %v990
        %1080 = vmatprep.subr.mxu0 0.0
        %1081 = vmatpush2.msra.mxu0 0.0
        %1082 = vmatprep.subr.mxu0 0.0
        %1083 = vmatpush2.msra.mxu0 0.0
        %1084 = vmatprep.subr.mxu0 0.0
        %1085 = vmatpush2.msra.mxu0 0.0
        %1086 = vmatprep.subr.mxu0 0.0
        %1087 = vmatpush2.msra.mxu0 0.0
        %1088 = vmatprep.subr.mxu0 0.0
        %1089 = vmatpush2.msra.mxu0 0.0
        %1090 = vmatprep.subr.mxu0 0.0
        %1091 = vmatpush2.msra.mxu0 0.0
        %1092 = vmatprep.subr.mxu0 0.0
        %1093 = vmatpush2.msra.mxu0 0.0
        %1094 = vmatprep.subr.mxu0 0.0
        %1095 = vmatpush2.msra.mxu0 0.0
        %1096 = vmatprep.subr.mxu0 0.0
        %1097 = vmatpush2.msra.mxu0 0.0
        %1098 = vmatprep.subr.mxu0 0.0
        %1099 = vmatpush2.msra.mxu0 0.0
        %1100 = vmatprep.subr.mxu0 0.0
        %1101 = vmatpush2.msra.mxu0 0.0
        %1102 = vmatprep.subr.mxu0 0.0
        %1103 = vmatpush2.msra.mxu0 0.0
        %1104 = vmatprep.subr.mxu0 0.0
        %1105 = vmatpush2.msra.mxu0 0.0
        %1106 = vmatprep.subr.mxu0 0.0
        %1107 = vmatpush2.msra.mxu0 0.0
        %1108 = vmatprep.subr.mxu0 0.0
        %1109 = vmatpush2.msra.mxu0 0.0
        %1110 = vmatprep.subr.mxu0 0.0
        %1111 = vmatpush2.msra.mxu0 0.0
        %1112 = vmatprep.mubr.f32.mxu0 0.0
        %1113 = vmatmul.mubr.f32.gmra.mxu0 %v997
        %v1114 = vpop.f32.mrf.mxu0
        %v1115 = vadd.f32 0.0, %v1114
        %v1116 = vpop.f32.mrf.mxu0
        %1117 = vmatprep.mubr.f32.mxu0 0.0
        %1118 = vmatmul.mubr.f32.gmra.mxu0 %v1000
        %v1119 = vpop.f32.mrf.mxu0
        %v1120 = vadd.f32 0.0, %v1119
        %v1121 = vpop.f32.mrf.mxu0
        %1122 = vmatprep.mubr.f32.mxu0 0.0
        %1123 = vmatmul.mubr.f32.gmra.mxu0 %v1003
        %v1124 = vpop.f32.mrf.mxu0
        %v1125 = vadd.f32 0.0, %v1124
        %v1126 = vpop.f32.mrf.mxu0
        %1127 = vmatprep.mubr.f32.mxu0 0.0
        %1128 = vmatmul.mubr.f32.gmra.mxu0 %v1006
        %v1129 = vpop.f32.mrf.mxu0
        %v1130 = vadd.f32 0.0, %v1129
        %v1131 = vpop.f32.mrf.mxu0
        %1132 = vmatprep.mubr.f32.mxu0 0.0
        %1133 = vmatmul.mubr.f32.gmra.mxu0 %v1009
        %v1134 = vpop.f32.mrf.mxu0
        %v1135 = vadd.f32 0.0, %v1134
        %v1136 = vpop.f32.mrf.mxu0
        %1137 = vmatprep.mubr.f32.mxu0 0.0
        %1138 = vmatmul.mubr.f32.gmra.mxu0 %v1012
        %v1139 = vpop.f32.mrf.mxu0
        %v1140 = vadd.f32 0.0, %v1139
        %v1141 = vpop.f32.mrf.mxu0
        %1142 = vmatprep.mubr.f32.mxu0 0.0
        %1143 = vmatmul.mubr.f32.gmra.mxu0 %v1015
        %v1144 = vpop.f32.mrf.mxu0
        %v1145 = vadd.f32 0.0, %v1144
        %v1146 = vpop.f32.mrf.mxu0
        %1147 = vmatprep.mubr.f32.mxu0 0.0
        %1148 = vmatmul.mubr.f32.gmra.mxu0 %v1018
        %v1149 = vpop.f32.mrf.mxu0
        %v1150 = vadd.f32 0.0, %v1149
        %v1151 = vpop.f32.mrf.mxu0
        %1152 = vmatprep.mubr.f32.mxu0 0.0
        %1153 = vmatmul.mubr.f32.gmra.mxu0 %v1021
        %v1154 = vpop.f32.mrf.mxu0
        %v1155 = vadd.f32 0.0, %v1154
        %v1156 = vpop.f32.mrf.mxu0
        %1157 = vmatprep.mubr.f32.mxu0 0.0
        %1158 = vmatmul.mubr.f32.gmra.mxu0 %v1024
        %v1159 = vpop.f32.mrf.mxu0
        %v1160 = vadd.f32 0.0, %v1159
        %v1161 = vpop.f32.mrf.mxu0
        %1162 = vmatprep.mubr.f32.mxu0 0.0
        %1163 = vmatmul.mubr.f32.gmra.mxu0 %v1027
        %v1164 = vpop.f32.mrf.mxu0
        %v1165 = vadd.f32 0.0, %v1164
        %v1166 = vpop.f32.mrf.mxu0
        %1167 = vmatprep.mubr.f32.mxu0 0.0
        %1168 = vmatmul.mubr.f32.gmra.mxu0 %v1030
        %v1169 = vpop.f32.mrf.mxu0
        %v1170 = vadd.f32 0.0, %v1169
        %v1171 = vpop.f32.mrf.mxu0
        %1172 = vmatprep.mubr.f32.mxu0 0.0
        %1173 = vmatmul.mubr.f32.gmra.mxu0 %v1033
        %v1174 = vpop.f32.mrf.mxu0
        %v1175 = vadd.f32 0.0, %v1174
        %v1176 = vpop.f32.mrf.mxu0
        %1177 = vmatprep.mubr.f32.mxu0 0.0
        %1178 = vmatmul.mubr.f32.gmra.mxu0 %v1036
        %v1179 = vpop.f32.mrf.mxu0
        %v1180 = vadd.f32 0.0, %v1179
        %v1181 = vpop.f32.mrf.mxu0
        %1182 = vmatprep.mubr.f32.mxu0 0.0
        %1183 = vmatmul.mubr.f32.gmra.mxu0 %v1039
        %v1184 = vpop.f32.mrf.mxu0
        %v1185 = vadd.f32 0.0, %v1184
        %v1186 = vpop.f32.mrf.mxu0
        %1187 = vmatprep.mubr.f32.mxu0 0.0
        %1188 = vmatmul.mubr.f32.gmra.mxu0 %v1042
        %v1189 = vpop.f32.mrf.mxu0
        %v1190 = vadd.f32 0.0, %v1189
        %v1191 = vpop.f32.mrf.mxu0
        %1192 = vdwg.mxu0
        %vm1193 = vcmask 64512
        %v1194 = vsel %vm1193, %v1115, 0.0
        %v1195 = vsel %vm1193, %v1120, 0.0
        %v1196 = vadd.f32 %v1194, %v1195
        %v1197 = vsel %vm1193, %v1125, 0.0
        %v1198 = vadd.f32 %v1196, %v1197
        %v1199 = vsel %vm1193, %v1130, 0.0
        %v1200 = vadd.f32 %v1198, %v1199
        %v1201 = vsel %vm1193, %v1135, 0.0
        %v1202 = vadd.f32 %v1200, %v1201
        %v1203 = vsel %vm1193, %v1140, 0.0
        %v1204 = vadd.f32 %v1202, %v1203
        %v1205 = vsel %vm1193, %v1145, 0.0
        %v1206 = vadd.f32 %v1204, %v1205
        %v1207 = vsel %vm1193, %v1150, 0.0
        %v1208 = vadd.f32 %v1206, %v1207
        %v1209 = vsel %vm1193, %v1155, 0.0
        %v1210 = vadd.f32 %v1208, %v1209
        %v1211 = vsel %vm1193, %v1160, 0.0
        %v1212 = vadd.f32 %v1210, %v1211
        %v1213 = vsel %vm1193, %v1165, 0.0
        %v1214 = vadd.f32 %v1212, %v1213
        %v1215 = vsel %vm1193, %v1170, 0.0
        %v1216 = vadd.f32 %v1214, %v1215
        %v1217 = vsel %vm1193, %v1175, 0.0
        %v1218 = vadd.f32 %v1216, %v1217
        %v1219 = vsel %vm1193, %v1180, 0.0
        %v1220 = vadd.f32 %v1218, %v1219
        %v1221 = vsel %vm1193, %v1185, 0.0
        %v1222 = vadd.f32 %v1220, %v1221
        %v1223 = vsel %vm1193, %v1190, 0.0
        %v1224 = vadd.f32 %v1222, %v1223
        %v1225 = vrot.slane %v1224, 4
        %v1226 = vadd.f32 %v1224, %v1225
        %v1227 = vrot.slane %v1226, 2
        %v1228 = vadd.f32 %v1226, %v1227
        %v1229 = vrot.slane %v1228, 1
        %v1230 = vadd.f32 %v1228, %v1229
        %v1231 = vmul.f32 %v1230, 0.0078125
        %v1232 = vsub.f32 %v1115, %v1231
        %v1233 = vsub.f32 %v1120, %v1231
        %v1234 = vsub.f32 %v1125, %v1231
        %v1235 = vsub.f32 %v1130, %v1231
        %v1236 = vsub.f32 %v1135, %v1231
        %v1237 = vsub.f32 %v1140, %v1231
        %v1238 = vsub.f32 %v1145, %v1231
        %v1239 = vsub.f32 %v1150, %v1231
        %v1240 = vsub.f32 %v1155, %v1231
        %v1241 = vsub.f32 %v1160, %v1231
        %v1242 = vsub.f32 %v1165, %v1231
        %v1243 = vsub.f32 %v1170, %v1231
        %v1244 = vsub.f32 %v1175, %v1231
        %v1245 = vsub.f32 %v1180, %v1231
        %v1246 = vsub.f32 %v1185, %v1231
        %v1247 = vsub.f32 %v1190, %v1231
        %v1248 = vmul.f32 %v1232, %v1232
        %v1249 = vmul.f32 %v1233, %v1233
        %v1250 = vmul.f32 %v1234, %v1234
        %v1251 = vmul.f32 %v1235, %v1235
        %v1252 = vmul.f32 %v1236, %v1236
        %v1253 = vmul.f32 %v1237, %v1237
        %v1254 = vmul.f32 %v1238, %v1238
        %v1255 = vmul.f32 %v1239, %v1239
        %v1256 = vmul.f32 %v1240, %v1240
        %v1257 = vmul.f32 %v1241, %v1241
        %v1258 = vmul.f32 %v1242, %v1242
        %v1259 = vmul.f32 %v1243, %v1243
        %v1260 = vmul.f32 %v1244, %v1244
        %v1261 = vmul.f32 %v1245, %v1245
        %v1262 = vmul.f32 %v1246, %v1246
        %v1263 = vmul.f32 %v1247, %v1247
        %v1264 = vsel %vm1193, %v1248, 0.0
        %v1265 = vsel %vm1193, %v1249, 0.0
        %v1266 = vadd.f32 %v1264, %v1265
        %v1267 = vsel %vm1193, %v1250, 0.0
        %v1268 = vadd.f32 %v1266, %v1267
        %v1269 = vsel %vm1193, %v1251, 0.0
        %v1270 = vadd.f32 %v1268, %v1269
        %v1271 = vsel %vm1193, %v1252, 0.0
        %v1272 = vadd.f32 %v1270, %v1271
        %v1273 = vsel %vm1193, %v1253, 0.0
        %v1274 = vadd.f32 %v1272, %v1273
        %v1275 = vsel %vm1193, %v1254, 0.0
        %v1276 = vadd.f32 %v1274, %v1275
        %v1277 = vsel %vm1193, %v1255, 0.0
        %v1278 = vadd.f32 %v1276, %v1277
        %v1279 = vsel %vm1193, %v1256, 0.0
        %v1280 = vadd.f32 %v1278, %v1279
        %v1281 = vsel %vm1193, %v1257, 0.0
        %v1282 = vadd.f32 %v1280, %v1281
        %v1283 = vsel %vm1193, %v1258, 0.0
        %v1284 = vadd.f32 %v1282, %v1283
        %v1285 = vsel %vm1193, %v1259, 0.0
        %v1286 = vadd.f32 %v1284, %v1285
        %v1287 = vsel %vm1193, %v1260, 0.0
        %v1288 = vadd.f32 %v1286, %v1287
        %v1289 = vsel %vm1193, %v1261, 0.0
        %v1290 = vadd.f32 %v1288, %v1289
        %v1291 = vsel %vm1193, %v1262, 0.0
        %v1292 = vadd.f32 %v1290, %v1291
        %v1293 = vsel %vm1193, %v1263, 0.0
        %v1294 = vadd.f32 %v1292, %v1293
        %v1295 = vrot.slane %v1294, 4
        %v1296 = vadd.f32 %v1294, %v1295
        %v1297 = vrot.slane %v1296, 2
        %v1298 = vadd.f32 %v1296, %v1297
        %v1299 = vrot.slane %v1298, 1
        %v1300 = vadd.f32 %v1298, %v1299
        %vm1301 = vcmask 1040384
        %v1302 = vsel %vm1301, %v1230, %v1300
        %vm1303 = vcmask 58368
        %1304 = vst.msk [vmem:[%s150] sm:$0x3] %vm1303, %v1302
        %s1305 = sand.u32 %s85, 1
        %s1306 = scalar_lea.sflag [#allocation4], %s1305
        %s1307 = sand.u32 %s85, 1
        %s1308 = smul.addr %s1307, 2
        %s1309 = scalar_lea.vmem [#allocation3], %s1308
        // Predicated region
        $region29: #{tpu_custom_call.1} parent=27 // pred_check
          %p1310 = pneg %p95
        $region30: #{tpu_custom_call.1} parent=27 // pred_check_branch
          %1312 = sbr.rel (%p1310) target = $region32
        $region31: #{tpu_custom_call.1} parent=27 // pred_region
          %s1314 = ssub.s32 32, 32
          %1315 = vsyncadd %s1306, %s1314
          %s1316 = smul.addr %s20, 2
          %s1317 = sadd.s32 %s21, %s1316
          %s1318 = smul.addr %s1317, 32
          %s1319 = scalar_lea.hbm %s2, %s1318
          %s1321 = sshll.u32 %s1309, 4
          %s1322 = int_to_ptr.vmem [resolvable:$true] %s1321
          %1324 = dma.vmem_to_hbm [thread:$0]  %s1322, 32, %s1319, %s1306
        $region32: #{tpu_custom_call.1} parent=27 // pred_fallthru
          _
      $region28: #{tpu_custom_call.1} parent=5 // pred_fallthru
        _
      %p1325 = scmp.le.s32.totalorder 2, %s11
      // Predicated region
      $region33: #{tpu_custom_call.1} parent=5 // pred_check
        %p1326 = pneg %p1325
      $region34: #{tpu_custom_call.1} parent=5 // pred_check_branch
        %1328 = sbr.rel (%p1326) target = $region36
      $region35: #{tpu_custom_call.1} parent=5 // pred_region
        %s1329 = ssub.s32 %s11, 2
        // Predicated region
        $region37: #{tpu_custom_call.1} parent=35 // pred_check
          %p1330 = pneg %p101
        $region38: #{tpu_custom_call.1} parent=35 // pred_check_branch
          %1332 = sbr.rel (%p1330) target = $region40
        $region39: #{tpu_custom_call.1} parent=35 // pred_region
          %s1333 = sand.u32 %s86, 1
          %s1334 = scalar_lea.sflag [#allocation4], %s1333
          %s1335 = sand.u32 %s86, 1
          %s1336 = smul.addr %s1335, 2
          %s1337 = scalar_lea.vmem [#allocation3], %s1336
          %1338 = dma.done %s1334, 32
        $region40: #{tpu_custom_call.1} parent=35 // pred_fallthru
          _
      $region36: #{tpu_custom_call.1} parent=5 // pred_fallthru
        _
    $region6: #{tpu_custom_call.1} parent=1 // loop_footer
      %s15 = sadd.s32 1, %s11
    $region7: #{tpu_custom_call.1} parent=1 // loop_footer_branch
      %10 = sbr.rel target = $region3
    $region8: #{tpu_custom_call.1} parent=1 // loop_exit
      _
    %1339 = vsyncpa [#allocation4], 1
    %s1340 = scalar_lea.sflag [#allocation4], 1
    %1341 = vsyncpa %s1340, 1

</llo_original>
